<compile_context>
chip_gen: v5e
topology: v5e:2x2
jax: 0.10.0
libtpu: 0.0.40
codegen_flags: <defaults>
</compile_context>

<pallas_src>
import functools

import jax
import jax.numpy as jnp
from jax.experimental import pallas as pl
from jax.experimental.pallas import tpu as pltpu


_MAX_TILE_LANES = 4096   # pair-A HW tile target (multiple of 128, 2048-8192 range)


def _cam_mse_kernel(coef_ref, sa_ref, ta_ref, ma_ref, sb_ref, tb_ref, mb_ref,
                    o_ref, acc_a_ref, acc_b_ref, *, hw_a):
    """Weighted squared-difference reduction.

    pair A (tiled along HW):  weight = coef[0] + coef[1] * map_a
    pair B (full slab/image): weight = coef[2] + coef[3] * map_b
    """
    j = pl.program_id(1)           # batch element within this core's share
    i = pl.program_id(2)           # HW tile of pair A
    nj = pl.num_programs(1)
    ni = pl.num_programs(2)

    ca0 = coef_ref[0]
    ca1 = coef_ref[1]
    cb0 = coef_ref[2]
    cb1 = coef_ref[3]

    # ---- pair A: (s, t, map) tile of shape (Ca, Ta) ----
    da = sa_ref[0].astype(jnp.float32) - ta_ref[0].astype(jnp.float32)   # (Ca, Ta)
    ch_a = jnp.sum(da * da, axis=0, keepdims=True)                       # (1, Ta)
    w_a = ca0 + ca1 * ma_ref[0].astype(jnp.float32)                      # (1, Ta)
    contrib_a = ch_a * w_a

    tile_a = sa_ref.shape[2]
    if hw_a % tile_a != 0:
        # Last tile along HW is partial: the out-of-bounds lanes hold
        # unspecified padding, so zero their contribution.
        lane = jax.lax.broadcasted_iota(jnp.int32, (1, tile_a), 1)
        contrib_a = jnp.where(lane < hw_a - i * tile_a, contrib_a, 0.0)

    first_a = jnp.logical_and(j == 0, i == 0)

    @pl.when(first_a)
    def _():
        acc_a_ref[...] = contrib_a          # direct store on the first step

    @pl.when(jnp.logical_not(first_a))
    def _():
        acc_a_ref[...] += contrib_a

    # ---- pair B: full per-image slab, computed once per batch element ----
    @pl.when(i == 0)
    def _():
        db = sb_ref[0].astype(jnp.float32) - tb_ref[0].astype(jnp.float32)  # (Cb, HWb)
        ch_b = jnp.sum(db * db, axis=0, keepdims=True)                      # (1, HWb)
        contrib_b = ch_b * (cb0 + cb1 * mb_ref[0].astype(jnp.float32))

        @pl.when(j == 0)
        def _():
            acc_b_ref[...] = contrib_b

        @pl.when(j != 0)
        def _():
            acc_b_ref[...] += contrib_b

    # ---- finalize: one cross-lane reduce + scalar store on the last step ----
    @pl.when(jnp.logical_and(j == nj - 1, i == ni - 1))
    def _():
        total = jnp.sum(acc_a_ref[...]) + jnp.sum(acc_b_ref[...])
        o_ref[...] = total.reshape(1, 1, 1)


def _tensorcores_per_chip():
    """2 on TPU v7x (two TensorCores per chip), 1 on v5e/v6e."""
    try:
        kind = jax.devices()[0].device_kind.lower()
    except Exception:
        return 1
    return 2 if "v7" in kind else 1


def _vmem_limit_bytes(per_step_bytes, scratch_bytes):
    """Scoped-VMEM budget: 2-deep pipeline + scratch + margin, capped at 75% of
    the chip's physical VMEM (generation-aware: 64 MiB on v7x)."""
    phys = 128 * 1024 * 1024
    try:
        phys = int(pltpu.get_tpu_info().vmem_capacity_bytes)
    except Exception:
        pass
    cap = (phys * 3) // 4
    want = 2 * per_step_bytes + scratch_bytes + (4 << 20)
    return int(max(min(want, cap), 16 << 20))


def _fused_weighted_mse_sum(sa, ta, ma, sb, tb, mb, coeffs,
                            *, max_tile_lanes=_MAX_TILE_LANES):
    """sum_hw (cA0 + cA1*ma) * sum_c (sa-ta)^2 + sum_hw (cB0 + cB1*mb) * sum_c (sb-tb)^2."""
    n, c_a, hw_a = sa.shape
    _, c_b, hw_b = sb.shape

    # HW tile of pair A: a multiple of 128 (or the full axis), target ~4096 lanes.
    if hw_a <= max_tile_lanes:
        tile_a = hw_a
    else:
        tile_a = max(128, (max_tile_lanes // 128) * 128)
    steps_a = pl.cdiv(hw_a, tile_a)

    cores = _tensorcores_per_chip()
    p = cores if (cores > 1 and n % cores == 0) else 1
    n_per_core = n // p

    def a_idx(pi, ji, ii):
        return (pi * n_per_core + ji, 0, ii)

    def b_idx(pi, ji, ii):
        return (pi * n_per_core + ji, 0, 0)   # same block for all inner steps

    itm = lambda x: x.dtype.itemsize
    per_step_bytes = (c_a * tile_a * (itm(sa) + itm(ta)) + tile_a * itm(ma)
                      + c_b * hw_b * (itm(sb) + itm(tb)) + hw_b * itm(mb))
    scratch_bytes = 4 * (tile_a + hw_b)

    if p > 1:
        core_parallel = getattr(pltpu, "CORE_PARALLEL", "parallel")
        dims = (core_parallel, "arbitrary", "arbitrary")
    else:
        dims = ("arbitrary", "arbitrary", "arbitrary")

    kernel = functools.partial(_cam_mse_kernel, hw_a=hw_a)

    partials = pl.pallas_call(
        kernel,
        out_shape=jax.ShapeDtypeStruct((p, 1, 1), jnp.float32),
        grid_spec=pltpu.PrefetchScalarGridSpec(
            num_scalar_prefetch=0,
            grid=(p, n_per_core, steps_a),
            in_specs=[
                pl.BlockSpec(memory_space=pltpu.MemorySpace.SMEM),   # coeffs (4,)
                pl.BlockSpec((1, c_a, tile_a), a_idx),               # sA
                pl.BlockSpec((1, c_a, tile_a), a_idx),               # tA
                pl.BlockSpec((1, 1, tile_a), a_idx),                 # mapA
                pl.BlockSpec((1, c_b, hw_b), b_idx),                 # sB
                pl.BlockSpec((1, c_b, hw_b), b_idx),                 # tB
                pl.BlockSpec((1, 1, hw_b), b_idx),                   # mapB
            ],
            out_specs=pl.BlockSpec((1, 1, 1), lambda pi, ji, ii: (pi, 0, 0)),
            scratch_shapes=[
                pltpu.VMEM((1, tile_a), jnp.float32),   # lane-partial sums, pair A
                pltpu.VMEM((1, hw_b), jnp.float32),     # lane-partial sums, pair B
            ],
        ),
        compiler_params=pltpu.CompilerParams(
            dimension_semantics=dims,
            vmem_limit_bytes=_vmem_limit_bytes(per_step_bytes, scratch_bytes),
        ),
    )(coeffs, sa, ta, ma, sb, tb, mb)

    return partials[0, 0, 0] if p == 1 else jnp.sum(partials)


def mse_loss_multires_cam(student_output1, teacher_output1,
                          student_output2, teacher_output2,
                          cam_map1, cam_map2,
                          alpha1, alpha2, alpha3,
                          *, max_tile_lanes=_MAX_TILE_LANES):
    """JAX/Pallas equivalent of MSELossMultiresCAM.forward, given the raw CAM maps.

    student_output1/teacher_output1: (N, C1, H1, W1) compression-module / teacher layers.1.
    student_output2/teacher_output2: (N, C2, H2, W2) backbone.layers.0 / teacher layers.2.
    cam_map1/cam_map2: (N, 1, h, w) raw XGradCAM maps for the two target layers.
    """
    # TODO(synk): the XGradCAM pass over the pretrained timm swin_s3_tiny_224
    # (self.cam(...)) has no Pallas equivalent; cam_map1/cam_map2 stand in for
    # raw_cam_maps[0]/raw_cam_maps[1] from the reference.
    n = student_output1.shape[0]
    # F.interpolate(mode='bilinear', align_corners=False) glue: half-pixel
    # bilinear, NO antialiasing (PyTorch does not antialias on downsample).
    map1 = jax.image.resize(cam_map1.astype(jnp.float32),
                            (n, 1) + tuple(student_output1.shape[2:]),
                            method="bilinear", antialias=False)
    map2 = jax.image.resize(cam_map2.astype(jnp.float32),
                            (n, 1) + tuple(student_output2.shape[2:]),
                            method="bilinear", antialias=False)

    def _flat(x):
        b, c, h, w = x.shape
        return x.reshape(b, c, h * w)        # free reshape, no HBM copy

    s1, t1 = _flat(student_output1), _flat(teacher_output1)
    s2, t2 = _flat(student_output2), _flat(teacher_output2)
    m1, m2 = _flat(map1), _flat(map2)

    a1 = jnp.asarray(alpha1, jnp.float32)
    a2 = jnp.asarray(alpha2, jnp.float32)
    a3 = jnp.asarray(alpha3, jnp.float32)
    zero = jnp.zeros((), jnp.float32)

    # weight(pair1) = alpha1 + alpha2*map1   (fuses d1 and d2)
    # weight(pair2) =      0 + alpha3*map2   (d3)
    # The larger pair is tiled along HW ("A"); the smaller one streams as one
    # slab per image ("B").
    bytes1 = 2 * s1.size * s1.dtype.itemsize
    bytes2 = 2 * s2.size * s2.dtype.itemsize
    if bytes1 >= bytes2:
        coeffs = jnp.stack([a1, a2, zero, a3])
        return _fused_weighted_mse_sum(s1, t1, m1, s2, t2, m2, coeffs,
                                       max_tile_lanes=max_tile_lanes)
    coeffs = jnp.stack([zero, a3, a1, a2])
    return _fused_weighted_mse_sum(s2, t2, m2, s1, t1, m1, coeffs,
                                   max_tile_lanes=max_tile_lanes)


if __name__ == "__main__":
    key = jax.random.PRNGKey(0)
    ks = jax.random.split(key, 6)

    N = 2
    C1, H1, W1 = 4, 16, 20     # compression-module output (pair 1)
    C2, H2, W2 = 8, 8, 8       # backbone.layers.0 output (pair 2)
    a1, a2, a3 = 1.0, 0.5, 0.25

    s1 = jax.random.normal(ks[0], (N, C1, H1, W1), jnp.float32)
    t1 = jax.random.normal(ks[1], (N, C1, H1, W1), jnp.float32)
    s2 = jax.random.normal(ks[2], (N, C2, H2, W2), jnp.float32)
    t2 = jax.random.normal(ks[3], (N, C2, H2, W2), jnp.float32)
    cam1 = jax.random.uniform(ks[4], (N, 1, 7, 7), jnp.float32)     # raw CAM map, layer 2
    cam2 = jax.random.uniform(ks[5], (N, 1, 14, 14), jnp.float32)   # raw CAM map, layer 3

    # Pure-JAX reference of the PyTorch forward (post-CAM part).
    def reference(s1_, t1_, s2_, t2_, c1_, c2_):
        m1 = jax.image.resize(c1_, (N, 1, s1_.shape[2], s1_.shape[3]),
                              method="bilinear", antialias=False)
        m2 = jax.image.resize(c2_, (N, 1, s2_.shape[2], s2_.shape[3]),
                              method="bilinear", antialias=False)
        d1 = jnp.sum((s1_ - t1_) ** 2) * a1
        d2 = jnp.sum((s1_ - t1_) ** 2 * m1) * a2
        d3 = jnp.sum((s2_ - t2_) ** 2 * m2) * a3
        return d1 + d2 + d3

    ref = reference(s1, t1, s2, t2, cam1, cam2)

    # 1) Default tiling (single HW tile per image at these small shapes).
    loss = jax.block_until_ready(
        mse_loss_multires_cam(s1, t1, s2, t2, cam1, cam2, a1, a2, a3))
    assert jnp.allclose(loss, ref, rtol=2e-5, atol=1e-4), (loss, ref)

    # 2) Forced small HW tile: exercises the multi-step inner grid axis and the
    #    masked partial tail (HW1 = 320 -> tiles of 128, 128, 64).
    loss_tiled = jax.block_until_ready(
        mse_loss_multires_cam(s1, t1, s2, t2, cam1, cam2, a1, a2, a3,
                              max_tile_lanes=128))
    assert jnp.allclose(loss_tiled, ref, rtol=2e-5, atol=1e-4), (loss_tiled, ref)

    # 3) Pair 2 larger than pair 1: exercises the tiled/slab pair swap.
    s2b = jax.random.normal(ks[2], (N, 16, 12, 12), jnp.float32)
    t2b = jax.random.normal(ks[3], (N, 16, 12, 12), jnp.float32)
    ref_b = reference(s1, t1, s2b, t2b, cam1, cam2)
    loss_b = jax.block_until_ready(
        mse_loss_multires_cam(s1, t1, s2b, t2b, cam1, cam2, a1, a2, a3))
    assert jnp.allclose(loss_b, ref_b, rtol=2e-5, atol=1e-4), (loss_b, ref_b)

    print("KERNEL_OK")
</pallas_src>

<mosaic_0001>
module attributes {stable_mosaic.version = 11 : i64} {
  func.func @_cam_mse_kernel(%arg0: i32, %arg1: i32, %arg2: i32, %arg3: memref<4xf32, #tpu.memory_space<smem>>, %arg4: memref<1x4x320xf32, #tpu.memory_space<vmem>>, %arg5: memref<1x4x320xf32, #tpu.memory_space<vmem>>, %arg6: memref<1x1x320xf32, #tpu.memory_space<vmem>>, %arg7: memref<1x8x64xf32, #tpu.memory_space<vmem>>, %arg8: memref<1x8x64xf32, #tpu.memory_space<vmem>>, %arg9: memref<1x1x64xf32, #tpu.memory_space<vmem>>, %arg10: memref<1x1x1xf32, #tpu.memory_space<vmem>>, %arg11: memref<1x320xf32, #tpu.memory_space<vmem>>, %arg12: memref<1x64xf32, #tpu.memory_space<vmem>>) attributes {dimension_semantics = [#tpu.dimension_semantics<arbitrary>, #tpu.dimension_semantics<arbitrary>, #tpu.dimension_semantics<arbitrary>], iteration_bounds = array<i64: 1, 2, 1>, scalar_prefetch = 0 : i64, scratch_operands = 2 : i64, tpu.core_type = #tpu.core_type<tc>, window_params = [{transform_indices = @transform_0, window_bounds = array<i64: 4>}, {transform_indices = @transform_1, window_bounds = array<i64: 1, 4, 320>}, {transform_indices = @transform_2, window_bounds = array<i64: 1, 4, 320>}, {transform_indices = @transform_3, window_bounds = array<i64: 1, 1, 320>}, {transform_indices = @transform_4, window_bounds = array<i64: 1, 8, 64>}, {transform_indices = @transform_5, window_bounds = array<i64: 1, 8, 64>}, {transform_indices = @transform_6, window_bounds = array<i64: 1, 1, 64>}, {transform_indices = @transform_7, window_bounds = array<i64: 1, 1, 1>}]} {
    %c0 = arith.constant 0 : index
    %0 = memref.load %arg3[%c0] : memref<4xf32, #tpu.memory_space<smem>>
    %c1 = arith.constant 1 : index
    %1 = memref.load %arg3[%c1] : memref<4xf32, #tpu.memory_space<smem>>
    %c2 = arith.constant 2 : index
    %2 = memref.load %arg3[%c2] : memref<4xf32, #tpu.memory_space<smem>>
    %c3 = arith.constant 3 : index
    %3 = memref.load %arg3[%c3] : memref<4xf32, #tpu.memory_space<smem>>
    %c0_0 = arith.constant 0 : index
    %c0_1 = arith.constant 0 : index
    %c0_2 = arith.constant 0 : index
    %4 = vector.load %arg4[%c0_0, %c0_1, %c0_2] : memref<1x4x320xf32, #tpu.memory_space<vmem>>, vector<1x4x320xf32>
    %5 = vector.shape_cast %4 : vector<1x4x320xf32> to vector<4x320xf32>
    %c0_3 = arith.constant 0 : index
    %c0_4 = arith.constant 0 : index
    %c0_5 = arith.constant 0 : index
    %6 = vector.load %arg5[%c0_3, %c0_4, %c0_5] : memref<1x4x320xf32, #tpu.memory_space<vmem>>, vector<1x4x320xf32>
    %7 = vector.shape_cast %6 : vector<1x4x320xf32> to vector<4x320xf32>
    %8 = arith.subf %5, %7 : vector<4x320xf32>
    %9 = arith.mulf %8, %8 : vector<4x320xf32>
    %cst = arith.constant dense<0.000000e+00> : vector<320xf32>
    %10 = vector.multi_reduction <add>, %9, %cst [0] : vector<4x320xf32> to vector<320xf32>
    %11 = vector.shape_cast %10 : vector<320xf32> to vector<1x320xf32>
    %c0_6 = arith.constant 0 : index
    %c0_7 = arith.constant 0 : index
    %c0_8 = arith.constant 0 : index
    %12 = vector.load %arg6[%c0_6, %c0_7, %c0_8] : memref<1x1x320xf32, #tpu.memory_space<vmem>>, vector<1x1x320xf32>
    %13 = vector.shape_cast %12 : vector<1x1x320xf32> to vector<1x320xf32>
    %14 = vector.broadcast %1 : f32 to vector<1x320xf32>
    %15 = arith.mulf %14, %13 : vector<1x320xf32>
    %16 = vector.broadcast %0 : f32 to vector<1x320xf32>
    %17 = arith.addf %16, %15 : vector<1x320xf32>
    %18 = arith.mulf %11, %17 : vector<1x320xf32>
    %c0_i32 = arith.constant 0 : i32
    %19 = arith.cmpi eq, %arg1, %c0_i32 : i32
    %c0_i32_9 = arith.constant 0 : i32
    %20 = arith.cmpi eq, %arg2, %c0_i32_9 : i32
    %21 = arith.andi %19, %20 : i1
    %22 = arith.extui %21 : i1 to i32
    %c0_i32_10 = arith.constant 0 : i32
    %23 = arith.cmpi ne, %22, %c0_i32_10 : i32
    scf.if %23 {
      %c0_16 = arith.constant 0 : index
      %c0_17 = arith.constant 0 : index
      %35 = vector.load %arg11[%c0_16, %c0_17] : memref<1x320xf32, #tpu.memory_space<vmem>>, vector<1x320xf32>
      tpu.vector_store %arg11[%c0_16, %c0_17], %18 {strides = array<i32>} : memref<1x320xf32, #tpu.memory_space<vmem>>, vector<1x320xf32>,
    } else {
    }
    %true = arith.constant true
    %24 = arith.xori %21, %true : i1
    %25 = arith.extui %24 : i1 to i32
    %c0_i32_11 = arith.constant 0 : i32
    %26 = arith.cmpi ne, %25, %c0_i32_11 : i32
    scf.if %26 {
      %c0_16 = arith.constant 0 : index
      %c0_17 = arith.constant 0 : index
      %35 = vector.load %arg11[%c0_16, %c0_17] : memref<1x320xf32, #tpu.memory_space<vmem>>, vector<1x320xf32>
      %36 = arith.addf %35, %18 : vector<1x320xf32>
      %c0_18 = arith.constant 0 : index
      %c0_19 = arith.constant 0 : index
      %37 = vector.load %arg11[%c0_18, %c0_19] : memref<1x320xf32, #tpu.memory_space<vmem>>, vector<1x320xf32>
      tpu.vector_store %arg11[%c0_18, %c0_19], %36 {strides = array<i32>} : memref<1x320xf32, #tpu.memory_space<vmem>>, vector<1x320xf32>,
    } else {
    }
    %c0_i32_12 = arith.constant 0 : i32
    %27 = arith.cmpi eq, %arg2, %c0_i32_12 : i32
    %28 = arith.extui %27 : i1 to i32
    %c0_i32_13 = arith.constant 0 : i32
    %29 = arith.cmpi ne, %28, %c0_i32_13 : i32
    scf.if %29 {
      %c0_16 = arith.constant 0 : index
      %c0_17 = arith.constant 0 : index
      %c0_18 = arith.constant 0 : index
      %35 = vector.load %arg7[%c0_16, %c0_17, %c0_18] : memref<1x8x64xf32, #tpu.memory_space<vmem>>, vector<1x8x64xf32>
      %36 = vector.shape_cast %35 : vector<1x8x64xf32> to vector<8x64xf32>
      %c0_19 = arith.constant 0 : index
      %c0_20 = arith.constant 0 : index
      %c0_21 = arith.constant 0 : index
      %37 = vector.load %arg8[%c0_19, %c0_20, %c0_21] : memref<1x8x64xf32, #tpu.memory_space<vmem>>, vector<1x8x64xf32>
      %38 = vector.shape_cast %37 : vector<1x8x64xf32> to vector<8x64xf32>
      %39 = arith.subf %36, %38 : vector<8x64xf32>
      %40 = arith.mulf %39, %39 : vector<8x64xf32>
      %cst_22 = arith.constant dense<0.000000e+00> : vector<64xf32>
      %41 = vector.multi_reduction <add>, %40, %cst_22 [0] : vector<8x64xf32> to vector<64xf32>
      %42 = vector.shape_cast %41 : vector<64xf32> to vector<1x64xf32>
      %c0_23 = arith.constant 0 : index
      %c0_24 = arith.constant 0 : index
      %c0_25 = arith.constant 0 : index
      %43 = vector.load %arg9[%c0_23, %c0_24, %c0_25] : memref<1x1x64xf32, #tpu.memory_space<vmem>>, vector<1x1x64xf32>
      %44 = vector.shape_cast %43 : vector<1x1x64xf32> to vector<1x64xf32>
      %45 = vector.broadcast %3 : f32 to vector<1x64xf32>
      %46 = arith.mulf %45, %44 : vector<1x64xf32>
      %47 = vector.broadcast %2 : f32 to vector<1x64xf32>
      %48 = arith.addf %47, %46 : vector<1x64xf32>
      %49 = arith.mulf %42, %48 : vector<1x64xf32>
      %c0_i32_26 = arith.constant 0 : i32
      %50 = arith.cmpi eq, %arg1, %c0_i32_26 : i32
      %51 = arith.extui %50 : i1 to i32
      %c0_i32_27 = arith.constant 0 : i32
      %52 = arith.cmpi ne, %51, %c0_i32_27 : i32
      scf.if %52 {
        %c0_30 = arith.constant 0 : index
        %c0_31 = arith.constant 0 : index
        %56 = vector.load %arg12[%c0_30, %c0_31] : memref<1x64xf32, #tpu.memory_space<vmem>>, vector<1x64xf32>
        tpu.vector_store %arg12[%c0_30, %c0_31], %49 {strides = array<i32>} : memref<1x64xf32, #tpu.memory_space<vmem>>, vector<1x64xf32>,
      } else {
      }
      %c0_i32_28 = arith.constant 0 : i32
      %53 = arith.cmpi ne, %arg1, %c0_i32_28 : i32
      %54 = arith.extui %53 : i1 to i32
      %c0_i32_29 = arith.constant 0 : i32
      %55 = arith.cmpi ne, %54, %c0_i32_29 : i32
      scf.if %55 {
        %c0_30 = arith.constant 0 : index
        %c0_31 = arith.constant 0 : index
        %56 = vector.load %arg12[%c0_30, %c0_31] : memref<1x64xf32, #tpu.memory_space<vmem>>, vector<1x64xf32>
        %57 = arith.addf %56, %49 : vector<1x64xf32>
        %c0_32 = arith.constant 0 : index
        %c0_33 = arith.constant 0 : index
        %58 = vector.load %arg12[%c0_32, %c0_33] : memref<1x64xf32, #tpu.memory_space<vmem>>, vector<1x64xf32>
        tpu.vector_store %arg12[%c0_32, %c0_33], %57 {strides = array<i32>} : memref<1x64xf32, #tpu.memory_space<vmem>>, vector<1x64xf32>,
      } else {
      }
    } else {
    }
    %c1_i32 = arith.constant 1 : i32
    %30 = arith.cmpi eq, %arg1, %c1_i32 : i32
    %c0_i32_14 = arith.constant 0 : i32
    %31 = arith.cmpi eq, %arg2, %c0_i32_14 : i32
    %32 = arith.andi %30, %31 : i1
    %33 = arith.extui %32 : i1 to i32
    %c0_i32_15 = arith.constant 0 : i32
    %34 = arith.cmpi ne, %33, %c0_i32_15 : i32
    scf.if %34 {
      %c0_16 = arith.constant 0 : index
      %c0_17 = arith.constant 0 : index
      %35 = vector.load %arg11[%c0_16, %c0_17] : memref<1x320xf32, #tpu.memory_space<vmem>>, vector<1x320xf32>
      %36 = vector.shape_cast %35 : vector<1x320xf32> to vector<1x1x320xf32>
      %cst_18 = arith.constant dense<0.000000e+00> : vector<1xf32>
      %37 = vector.multi_reduction <add>, %36, %cst_18 [1, 2] : vector<1x1x320xf32> to vector<1xf32>
      %38 = vector.shape_cast %37 : vector<1xf32> to vector<1x1x1xf32>
      %39 = vector.extract %38[0, 0, 0] : f32 from vector<1x1x1xf32>
      %c0_19 = arith.constant 0 : index
      %c0_20 = arith.constant 0 : index
      %40 = vector.load %arg12[%c0_19, %c0_20] : memref<1x64xf32, #tpu.memory_space<vmem>>, vector<1x64xf32>
      %41 = vector.shape_cast %40 : vector<1x64xf32> to vector<1x1x64xf32>
      %cst_21 = arith.constant dense<0.000000e+00> : vector<1xf32>
      %42 = vector.multi_reduction <add>, %41, %cst_21 [1, 2] : vector<1x1x64xf32> to vector<1xf32>
      %43 = vector.shape_cast %42 : vector<1xf32> to vector<1x1x1xf32>
      %44 = vector.extract %43[0, 0, 0] : f32 from vector<1x1x1xf32>
      %45 = arith.addf %39, %44 : f32
      %46 = vector.broadcast %45 : f32 to vector<1x1x1xf32>
      %c0_22 = arith.constant 0 : index
      %c0_23 = arith.constant 0 : index
      %c0_24 = arith.constant 0 : index
      %47 = vector.load %arg10[%c0_22, %c0_23, %c0_24] : memref<1x1x1xf32, #tpu.memory_space<vmem>>, vector<1x1x1xf32>
      tpu.vector_store %arg10[%c0_22, %c0_23, %c0_24], %46 {strides = array<i32>} : memref<1x1x1xf32, #tpu.memory_space<vmem>>, vector<1x1x1xf32>,
    } else {
    }
    return
  }
  func.func @transform_0(%arg0: i32, %arg1: i32, %arg2: i32) -> i32 {
    %c0_i32 = arith.constant 0 : i32
    %c0_i32_0 = arith.constant 0 : i32
    return %c0_i32 : i32
  }
  func.func @transform_1(%arg0: i32, %arg1: i32, %arg2: i32) -> (i32, i32, i32) {
    %c2_i32 = arith.constant 2 : i32
    %0 = arith.muli %arg0, %c2_i32 : i32
    %1 = arith.addi %0, %arg1 : i32
    %c0_i32 = arith.constant 0 : i32
    %c0_i32_0 = arith.constant 0 : i32
    return %1, %c0_i32, %arg2 : i32, i32, i32
  }
  func.func @transform_2(%arg0: i32, %arg1: i32, %arg2: i32) -> (i32, i32, i32) {
    %c2_i32 = arith.constant 2 : i32
    %0 = arith.muli %arg0, %c2_i32 : i32
    %1 = arith.addi %0, %arg1 : i32
    %c0_i32 = arith.constant 0 : i32
    %c0_i32_0 = arith.constant 0 : i32
    return %1, %c0_i32, %arg2 : i32, i32, i32
  }
  func.func @transform_3(%arg0: i32, %arg1: i32, %arg2: i32) -> (i32, i32, i32) {
    %c2_i32 = arith.constant 2 : i32
    %0 = arith.muli %arg0, %c2_i32 : i32
    %1 = arith.addi %0, %arg1 : i32
    %c0_i32 = arith.constant 0 : i32
    %c0_i32_0 = arith.constant 0 : i32
    return %1, %c0_i32, %arg2 : i32, i32, i32
  }
  func.func @transform_4(%arg0: i32, %arg1: i32, %arg2: i32) -> (i32, i32, i32) {
    %c2_i32 = arith.constant 2 : i32
    %0 = arith.muli %arg0, %c2_i32 : i32
    %1 = arith.addi %0, %arg1 : i32
    %c0_i32 = arith.constant 0 : i32
    %c0_i32_0 = arith.constant 0 : i32
    %c0_i32_1 = arith.constant 0 : i32
    return %1, %c0_i32, %c0_i32_0 : i32, i32, i32
  }
  func.func @transform_5(%arg0: i32, %arg1: i32, %arg2: i32) -> (i32, i32, i32) {
    %c2_i32 = arith.constant 2 : i32
    %0 = arith.muli %arg0, %c2_i32 : i32
    %1 = arith.addi %0, %arg1 : i32
    %c0_i32 = arith.constant 0 : i32
    %c0_i32_0 = arith.constant 0 : i32
    %c0_i32_1 = arith.constant 0 : i32
    return %1, %c0_i32, %c0_i32_0 : i32, i32, i32
  }
  func.func @transform_6(%arg0: i32, %arg1: i32, %arg2: i32) -> (i32, i32, i32) {
    %c2_i32 = arith.constant 2 : i32
    %0 = arith.muli %arg0, %c2_i32 : i32
    %1 = arith.addi %0, %arg1 : i32
    %c0_i32 = arith.constant 0 : i32
    %c0_i32_0 = arith.constant 0 : i32
    %c0_i32_1 = arith.constant 0 : i32
    return %1, %c0_i32, %c0_i32_0 : i32, i32, i32
  }
  func.func @transform_7(%arg0: i32, %arg1: i32, %arg2: i32) -> (i32, i32, i32) {
    %c0_i32 = arith.constant 0 : i32
    %c0_i32_0 = arith.constant 0 : i32
    %c0_i32_1 = arith.constant 0 : i32
    return %arg0, %c0_i32, %c0_i32_0 : i32, i32, i32
  }
}

</mosaic_0001>

<llo_original>
// kernel: tpu_custom_call.1
$region0: #{tpu_custom_call.1}
  #allocation0 [shape = 'u32[]', space=smem, size = 0x4, offset = 0x4, fixed_abs, tag = 'smem constant byte address 0x4 - core index']
  #allocation1 [shape = 'u32[72,128]{1,0:T(1,128)}', space=vmem, size = 0x9000, scoped, tag = 'internal scratch']
  #allocation2 [shape = 'f32[1,320]{1,0:T(1,128)}', space=vmem, size = 0x600, scoped, tag = 'scratch operand']
  #allocation3 [shape = 'f32[1,64]{1,0:T(1,128)}', space=vmem, size = 0x200, scoped, tag = 'scratch operand']
  %s0 = inlined_call_operand.hbm [shape: f32[4], index: 0, kind: input, shape index: {}]
  %s1 = inlined_call_operand.hbm [shape: f32[2,4,320], index: 1, kind: input, shape index: {}]
  %s2 = inlined_call_operand.hbm [shape: f32[2,4,320], index: 2, kind: input, shape index: {}]
  %s3 = inlined_call_operand.hbm [shape: f32[2,1,320], index: 3, kind: input, shape index: {}]
  %s4 = inlined_call_operand.hbm [shape: f32[2,8,64], index: 4, kind: input, shape index: {}]
  %s5 = inlined_call_operand.hbm [shape: f32[2,8,64], index: 5, kind: input, shape index: {}]
  %s6 = inlined_call_operand.vmem [shape: f32[2,1,64], index: 6, kind: input, shape index: {}]
  %s7 = inlined_call_operand.hbm [shape: f32[1,1,1], index: 7, kind: output, shape index: {}]
  %s8 = sld [smem:[#allocation0]]
  $region109: #{tpu_custom_call.1} parent=0
    _
  %s10 = ssub.s32 1, %s8
  %s11 = scalar_select 0, %s10, %s8
  $region1: #{tpu_custom_call.1} parent=0
    #allocation4 [shape = 'u8[512]{0}', space=smem, size = 0x200, scoped, tag = 'input window, operand 0, single buffered']
    #allocation5 [shape = 's32[2]{0}', space=sflag, size = 0x8, scoped, tag = 'scoped memory for tpu_custom_call.1']
    #allocation6 [shape = 's32[2]{0}', space=sflag, size = 0x8, scoped, tag = 'scoped memory for tpu_custom_call.1']
    #allocation7 [shape = 's32[2]{0}', space=sflag, size = 0x8, scoped, tag = 'scoped memory for tpu_custom_call.1']
    #allocation8 [shape = 'u8[12288]{0}', space=vmem, size = 0x3000, scoped, tag = 'input window, operand 1']
    #allocation9 [shape = 'u8[12288]{0}', space=vmem, size = 0x3000, scoped, tag = 'input window, operand 2']
    #allocation10 [shape = 's32[2]{0}', space=sflag, size = 0x8, scoped, tag = 'scoped memory for tpu_custom_call.1']
    #allocation11 [shape = 'u8[3072]{0}', space=vmem, size = 0xc00, scoped, tag = 'input window, operand 3']
    #allocation12 [shape = 'u8[8192]{0}', space=vmem, size = 0x2000, scoped, tag = 'input window, operand 4']
    #allocation13 [shape = 's32[2]{0}', space=sflag, size = 0x8, scoped, tag = 'scoped memory for tpu_custom_call.1']
    #allocation14 [shape = 'u8[8192]{0}', space=vmem, size = 0x2000, scoped, tag = 'input window, operand 5']
    #allocation15 [shape = 'u8[512]{0}', space=vmem, size = 0x400, scoped, tag = 'output window, operand 0, single buffered']
    %12 = vsyncpa [#allocation7], 0
    %13 = vsyncpa [#allocation5], 0
    %s14 = scalar_lea.sflag [#allocation5], 1
    %15 = vsyncpa %s14, 0
    %16 = vsyncpa [#allocation10], 0
    %s17 = scalar_lea.sflag [#allocation10], 1
    %18 = vsyncpa %s17, 0
    %19 = vsyncpa [#allocation13], 0
    %s20 = scalar_lea.sflag [#allocation13], 1
    %21 = vsyncpa %s20, 0
    %22 = vsyncpa [#allocation6], 0
    loop: start=0, step=1, limit=4
    $region2: #{tpu_custom_call.1} parent=1 // loop_pre_header
      _
    $region3: #{tpu_custom_call.1} parent=1 // loop_header
      %s24 = sphi 0, %s28
      %p25 = scmp.ge.s32.totalorder %s24, 4
      %s31 = sphi 0, %s50
      %s32 = sphi 0, %s46
      %s33 = sphi 0, %s42
      %s34 = sphi 0, %s31
      %s35 = sphi 0, %s32
      %s36 = sphi 0, %s33
      %s37 = sphi 0, %s34
      %s38 = sphi 0, %s35
      %s39 = sphi 0, %s36
      %s51 = sphi 0, %s51
      %s53 = sphi 0, %s51
      %s54 = sphi 0, %s53
      %s68 = sphi 0, %s54
      %s80 = sphi 0, %s82
      %s83 = sphi 0, %s80
      %s84 = sphi 0, %s83
      %s100 = sphi 0, %s84
      %s112 = sphi 0, %s114
      %s115 = sphi 0, %s112
      %s116 = sphi 0, %s115
      %s132 = sphi 0, %s116
      %s144 = sphi 0, %s146
      %s147 = sphi 0, %s144
      %s148 = sphi 0, %s147
      %s164 = sphi 0, %s148
      %s174 = sphi 0, %s176
      %s177 = sphi 0, %s174
      %s178 = sphi 0, %s177
      %s194 = sphi 0, %s178
      %s204 = sphi 0, %s206
      %s207 = sphi 0, %s204
      %s208 = sphi 0, %s207
      %s224 = sphi 0, %s208
      %s234 = sphi 0, %s236
      %s237 = sphi 0, %s234
      %s238 = sphi 0, %s237
      %s254 = sphi 0, %s238
      %s260 = sphi 0, %s262
      %s263 = sphi 0, %s260
      %s264 = sphi 0, %s263
      %s280 = sphi 0, %s264
    $region4: #{tpu_custom_call.1} parent=1 // loop_header_branch
      %27 = sbr.rel (%p25) target = $region8
    $region5: #{tpu_custom_call.1} parent=1 // loop_body
      %s29 = ssub.s32 %s24, 1
      %s30 = ssub.s32 %s24, 2
      %s40 = sadd.s32 1, %s33
      %p41 = scmp.ge.s32.totalorder %s40, 1
      %s42 = scalar_select %p41, 0, %s40
      %s43 = sadd.s32 1, %s32
      %s44 = scalar_select %p41, %s43, %s32
      %p45 = scmp.ge.s32.totalorder %s44, 2
      %s46 = scalar_select %p45, 0, %s44
      %s47 = sadd.s32 1, %s31
      %s48 = scalar_select %p45, %s47, %s31
      %p49 = scmp.ge.s32.totalorder %s48, 1
      %s50 = scalar_select %p49, 0, %s48
      %s52 = sadd.s32 %s51, 1
      %p55 = scmp.eq.s32.totalorder %s24, 1
      %p56 = scmp.ne.s32.totalorder %s51, %s53
      %p57 = scmp.eq.s32.totalorder %s24, 0
      %p58 = por %p56, %p57
      %p59 = scmp.ne.s32.totalorder %s51, %s53
      %p60 = scmp.eq.s32.totalorder %s29, 1
      %p61 = por %p59, %p60
      %p62 = scmp.ne.s32.totalorder %s53, %s54
      %p63 = scmp.eq.s32.totalorder %s29, 0
      %p64 = por %p62, %p63
      %p65 = scmp.ne.s32.totalorder %s53, %s54
      %p66 = scmp.eq.s32.totalorder %s30, 1
      %p67 = por %p65, %p66
      %p69 = scmp.ne.s32.totalorder %s54, %s68
      %p70 = scmp.eq.s32.totalorder %s30, 0
      %p71 = por %p69, %p70
      %s72 = smul.u32 %s31, 2
      %s73 = sadd.s32 %s72, %s32
      %s74 = smul.u32 %s50, 2
      %s75 = sadd.s32 %s74, %s46
      %s76 = ssub.s32 %s73, %s75
      %s77 = ssub.s32 %s33, %s42
      %s78 = sor.u32 %s76, %s77
      %p79 = scmp.eq.s32.totalorder %s78, 0
      %s81 = sadd.s32 %s80, 1
      %s82 = scalar_select %p79, %s80, %s81
      %p85 = pneg %p79
      %p86 = scmp.eq.s32.totalorder %s24, 1
      %p87 = por %p85, %p86
      %p88 = scmp.ne.s32.totalorder %s80, %s83
      %p89 = scmp.eq.s32.totalorder %s24, 0
      %p90 = por %p88, %p89
      %p91 = scmp.ne.s32.totalorder %s80, %s83
      %p92 = scmp.eq.s32.totalorder %s29, 1
      %p93 = por %p91, %p92
      %p94 = scmp.ne.s32.totalorder %s83, %s84
      %p95 = scmp.eq.s32.totalorder %s29, 0
      %p96 = por %p94, %p95
      %p97 = scmp.ne.s32.totalorder %s83, %s84
      %p98 = scmp.eq.s32.totalorder %s30, 1
      %p99 = por %p97, %p98
      %p101 = scmp.ne.s32.totalorder %s84, %s100
      %p102 = scmp.eq.s32.totalorder %s30, 0
      %p103 = por %p101, %p102
      %s104 = smul.u32 %s31, 2
      %s105 = sadd.s32 %s104, %s32
      %s106 = smul.u32 %s50, 2
      %s107 = sadd.s32 %s106, %s46
      %s108 = ssub.s32 %s105, %s107
      %s109 = ssub.s32 %s33, %s42
      %s110 = sor.u32 %s108, %s109
      %p111 = scmp.eq.s32.totalorder %s110, 0
      %s113 = sadd.s32 %s112, 1
      %s114 = scalar_select %p111, %s112, %s113
      %p117 = pneg %p111
      %p118 = scmp.eq.s32.totalorder %s24, 1
      %p119 = por %p117, %p118
      %p120 = scmp.ne.s32.totalorder %s112, %s115
      %p121 = scmp.eq.s32.totalorder %s24, 0
      %p122 = por %p120, %p121
      %p123 = scmp.ne.s32.totalorder %s112, %s115
      %p124 = scmp.eq.s32.totalorder %s29, 1
      %p125 = por %p123, %p124
      %p126 = scmp.ne.s32.totalorder %s115, %s116
      %p127 = scmp.eq.s32.totalorder %s29, 0
      %p128 = por %p126, %p127
      %p129 = scmp.ne.s32.totalorder %s115, %s116
      %p130 = scmp.eq.s32.totalorder %s30, 1
      %p131 = por %p129, %p130
      %p133 = scmp.ne.s32.totalorder %s116, %s132
      %p134 = scmp.eq.s32.totalorder %s30, 0
      %p135 = por %p133, %p134
      %s136 = smul.u32 %s31, 2
      %s137 = sadd.s32 %s136, %s32
      %s138 = smul.u32 %s50, 2
      %s139 = sadd.s32 %s138, %s46
      %s140 = ssub.s32 %s137, %s139
      %s141 = ssub.s32 %s33, %s42
      %s142 = sor.u32 %s140, %s141
      %p143 = scmp.eq.s32.totalorder %s142, 0
      %s145 = sadd.s32 %s144, 1
      %s146 = scalar_select %p143, %s144, %s145
      %p149 = pneg %p143
      %p150 = scmp.eq.s32.totalorder %s24, 1
      %p151 = por %p149, %p150
      %p152 = scmp.ne.s32.totalorder %s144, %s147
      %p153 = scmp.eq.s32.totalorder %s24, 0
      %p154 = por %p152, %p153
      %p155 = scmp.ne.s32.totalorder %s144, %s147
      %p156 = scmp.eq.s32.totalorder %s29, 1
      %p157 = por %p155, %p156
      %p158 = scmp.ne.s32.totalorder %s147, %s148
      %p159 = scmp.eq.s32.totalorder %s29, 0
      %p160 = por %p158, %p159
      %p161 = scmp.ne.s32.totalorder %s147, %s148
      %p162 = scmp.eq.s32.totalorder %s30, 1
      %p163 = por %p161, %p162
      %p165 = scmp.ne.s32.totalorder %s148, %s164
      %p166 = scmp.eq.s32.totalorder %s30, 0
      %p167 = por %p165, %p166
      %s168 = smul.u32 %s31, 2
      %s169 = sadd.s32 %s168, %s32
      %s170 = smul.u32 %s50, 2
      %s171 = sadd.s32 %s170, %s46
      %s172 = ssub.s32 %s169, %s171
      %p173 = scmp.eq.s32.totalorder %s172, 0
      %s175 = sadd.s32 %s174, 1
      %s176 = scalar_select %p173, %s174, %s175
      %p179 = pneg %p173
      %p180 = scmp.eq.s32.totalorder %s24, 1
      %p181 = por %p179, %p180
      %p182 = scmp.ne.s32.totalorder %s174, %s177
      %p183 = scmp.eq.s32.totalorder %s24, 0
      %p184 = por %p182, %p183
      %p185 = scmp.ne.s32.totalorder %s174, %s177
      %p186 = scmp.eq.s32.totalorder %s29, 1
      %p187 = por %p185, %p186
      %p188 = scmp.ne.s32.totalorder %s177, %s178
      %p189 = scmp.eq.s32.totalorder %s29, 0
      %p190 = por %p188, %p189
      %p191 = scmp.ne.s32.totalorder %s177, %s178
      %p192 = scmp.eq.s32.totalorder %s30, 1
      %p193 = por %p191, %p192
      %p195 = scmp.ne.s32.totalorder %s178, %s194
      %p196 = scmp.eq.s32.totalorder %s30, 0
      %p197 = por %p195, %p196
      %s198 = smul.u32 %s31, 2
      %s199 = sadd.s32 %s198, %s32
      %s200 = smul.u32 %s50, 2
      %s201 = sadd.s32 %s200, %s46
      %s202 = ssub.s32 %s199, %s201
      %p203 = scmp.eq.s32.totalorder %s202, 0
      %s205 = sadd.s32 %s204, 1
      %s206 = scalar_select %p203, %s204, %s205
      %p209 = pneg %p203
      %p210 = scmp.eq.s32.totalorder %s24, 1
      %p211 = por %p209, %p210
      %p212 = scmp.ne.s32.totalorder %s204, %s207
      %p213 = scmp.eq.s32.totalorder %s24, 0
      %p214 = por %p212, %p213
      %p215 = scmp.ne.s32.totalorder %s204, %s207
      %p216 = scmp.eq.s32.totalorder %s29, 1
      %p217 = por %p215, %p216
      %p218 = scmp.ne.s32.totalorder %s207, %s208
      %p219 = scmp.eq.s32.totalorder %s29, 0
      %p220 = por %p218, %p219
      %p221 = scmp.ne.s32.totalorder %s207, %s208
      %p222 = scmp.eq.s32.totalorder %s30, 1
      %p223 = por %p221, %p222
      %p225 = scmp.ne.s32.totalorder %s208, %s224
      %p226 = scmp.eq.s32.totalorder %s30, 0
      %p227 = por %p225, %p226
      %s228 = smul.u32 %s31, 2
      %s229 = sadd.s32 %s228, %s32
      %s230 = smul.u32 %s50, 2
      %s231 = sadd.s32 %s230, %s46
      %s232 = ssub.s32 %s229, %s231
      %p233 = scmp.eq.s32.totalorder %s232, 0
      %s235 = sadd.s32 %s234, 1
      %s236 = scalar_select %p233, %s234, %s235
      %p239 = pneg %p233
      %p240 = scmp.eq.s32.totalorder %s24, 1
      %p241 = por %p239, %p240
      %p242 = scmp.ne.s32.totalorder %s234, %s237
      %p243 = scmp.eq.s32.totalorder %s24, 0
      %p244 = por %p242, %p243
      %p245 = scmp.ne.s32.totalorder %s234, %s237
      %p246 = scmp.eq.s32.totalorder %s29, 1
      %p247 = por %p245, %p246
      %p248 = scmp.ne.s32.totalorder %s237, %s238
      %p249 = scmp.eq.s32.totalorder %s29, 0
      %p250 = por %p248, %p249
      %p251 = scmp.ne.s32.totalorder %s237, %s238
      %p252 = scmp.eq.s32.totalorder %s30, 1
      %p253 = por %p251, %p252
      %p255 = scmp.ne.s32.totalorder %s238, %s254
      %p256 = scmp.eq.s32.totalorder %s30, 0
      %p257 = por %p255, %p256
      %s258 = ssub.s32 %s31, %s50
      %p259 = scmp.eq.s32.totalorder %s258, 0
      %s261 = sadd.s32 %s260, 1
      %s262 = scalar_select %p259, %s260, %s261
      %p265 = pneg %p259
      %p266 = scmp.eq.s32.totalorder %s24, 1
      %p267 = por %p265, %p266
      %p268 = scmp.ne.s32.totalorder %s260, %s263
      %p269 = scmp.eq.s32.totalorder %s24, 0
      %p270 = por %p268, %p269
      %p271 = scmp.ne.s32.totalorder %s260, %s263
      %p272 = scmp.eq.s32.totalorder %s29, 1
      %p273 = por %p271, %p272
      %p274 = scmp.ne.s32.totalorder %s263, %s264
      %p275 = scmp.eq.s32.totalorder %s29, 0
      %p276 = por %p274, %p275
      %p277 = scmp.ne.s32.totalorder %s263, %s264
      %p278 = scmp.eq.s32.totalorder %s30, 1
      %p279 = por %p277, %p278
      %p281 = scmp.ne.s32.totalorder %s264, %s280
      %p282 = scmp.eq.s32.totalorder %s30, 0
      %p283 = por %p281, %p282
      %p284 = scmp.le.s32.totalorder 1, %s24
      %p285 = scmp.lt.s32.totalorder %s24, 3
      %p286 = pnand %p284, %p285
      %p287 = pneg %p286
      // Predicated region
      $region9: #{tpu_custom_call.1} parent=5 // pred_check
        _
      $region10: #{tpu_custom_call.1} parent=5 // pred_check_branch
        %289 = sbr.rel (%p286) target = $region12
      $region11: #{tpu_custom_call.1} parent=5 // pred_region
        %s290 = ssub.s32 %s24, 1
        // Predicated region
        $region13: #{tpu_custom_call.1} parent=11 // pred_check
          %p291 = pneg %p64
        $region14: #{tpu_custom_call.1} parent=11 // pred_check_branch
          %293 = sbr.rel (%p291) target = $region16
        $region15: #{tpu_custom_call.1} parent=11 // pred_region
          %295 = vsyncadd [#allocation7], 0
          %s297 = sshll.u32 %s0, 4
          %s298 = int_to_ptr.hbm [resolvable:$true] %s297
          %300 = dma.hbm_to_smem %s298, 16, [#allocation4], [#allocation7]
        $region16: #{tpu_custom_call.1} parent=11 // pred_fallthru
          _
      $region12: #{tpu_custom_call.1} parent=5 // pred_fallthru
        _
      %p301 = scmp.lt.s32.totalorder %s24, 2
      // Predicated region
      $region17: #{tpu_custom_call.1} parent=5 // pred_check
        %p302 = pneg %p301
      $region18: #{tpu_custom_call.1} parent=5 // pred_check_branch
        %304 = sbr.rel (%p302) target = $region20
      $region19: #{tpu_custom_call.1} parent=5 // pred_region
        // Predicated region
        $region21: #{tpu_custom_call.1} parent=19 // pred_check
          %p305 = pneg %p90
        $region22: #{tpu_custom_call.1} parent=19 // pred_check_branch
          %307 = sbr.rel (%p305) target = $region24
        $region23: #{tpu_custom_call.1} parent=19 // pred_region
          %s308 = sand.u32 %s80, 1
          %s309 = scalar_lea.sflag [#allocation5], %s308
          %s310 = sand.u32 %s80, 1
          %s311 = smul.addr %s310, 12
          %s312 = scalar_lea.vmem [#allocation8], %s311
          %s313 = smul.u32 %s31, 2
          %s314 = sadd.s32 %s313, %s32
          %s315 = smul.u32 3, %s33
          %317 = vsyncadd %s309, 0
          %s318 = smul.addr %s314, 3
          %s319 = sadd.s32 %s315, %s318
          %s320 = smul.addr %s319, 4
          %s321 = scalar_lea.hbm %s1, %s320
          %s323 = sshll.u32 %s321, 4
          %s324 = int_to_ptr.hbm [resolvable:$true] %s323
          %s325 = sshll.u32 %s312, 4
          %s326 = int_to_ptr.vmem [resolvable:$true] %s325
          %328 = dma.hbm_to_vmem [thread:$0]  %s324, 192, %s326, %s309
        $region24: #{tpu_custom_call.1} parent=19 // pred_fallthru
          _
        // Predicated region
        $region25: #{tpu_custom_call.1} parent=19 // pred_check
          %p329 = pneg %p122
        $region26: #{tpu_custom_call.1} parent=19 // pred_check_branch
          %331 = sbr.rel (%p329) target = $region28
        $region27: #{tpu_custom_call.1} parent=19 // pred_region
          %s332 = sand.u32 %s24, 1
          %s333 = scalar_lea.sflag [#allocation10], %s332
          %s334 = sand.u32 %s112, 1
          %s335 = smul.addr %s334, 12
          %s336 = scalar_lea.vmem [#allocation9], %s335
          %s337 = smul.u32 %s31, 2
          %s338 = sadd.s32 %s337, %s32
          %s339 = smul.u32 3, %s33
          %341 = vsyncadd %s333, 0
          %s342 = smul.addr %s338, 3
          %s343 = sadd.s32 %s339, %s342
          %s344 = smul.addr %s343, 4
          %s345 = scalar_lea.hbm %s2, %s344
          %s347 = sshll.u32 %s345, 4
          %s348 = int_to_ptr.hbm [resolvable:$true] %s347
          %s349 = sshll.u32 %s336, 4
          %s350 = int_to_ptr.vmem [resolvable:$true] %s349
          %352 = dma.hbm_to_vmem [thread:$0]  %s348, 192, %s350, %s333
        $region28: #{tpu_custom_call.1} parent=19 // pred_fallthru
          _
        // Predicated region
        $region29: #{tpu_custom_call.1} parent=19 // pred_check
          %p353 = pneg %p154
        $region30: #{tpu_custom_call.1} parent=19 // pred_check_branch
          %355 = sbr.rel (%p353) target = $region32
        $region31: #{tpu_custom_call.1} parent=19 // pred_region
          %s356 = sand.u32 %s24, 1
          %s357 = scalar_lea.sflag [#allocation10], %s356
          %s358 = sand.u32 %s144, 1
          %s359 = smul.addr %s358, 3
          %s360 = scalar_lea.vmem [#allocation11], %s359
          %s361 = smul.u32 %s31, 2
          %s362 = sadd.s32 %s361, %s32
          %s363 = smul.u32 3, %s33
          %365 = vsyncadd %s357, 0
          %s366 = smul.addr %s362, 3
          %s367 = sadd.s32 %s363, %s366
          %s368 = scalar_lea.hbm %s3, %s367
          %s370 = sshll.u32 %s368, 4
          %s371 = int_to_ptr.hbm [resolvable:$true] %s370
          %s372 = sshll.u32 %s360, 4
          %s373 = int_to_ptr.vmem [resolvable:$true] %s372
          %375 = dma.hbm_to_vmem [thread:$0]  %s371, 48, %s373, %s357
        $region32: #{tpu_custom_call.1} parent=19 // pred_fallthru
          _
        // Predicated region
        $region33: #{tpu_custom_call.1} parent=19 // pred_check
          %p376 = pneg %p184
        $region34: #{tpu_custom_call.1} parent=19 // pred_check_branch
          %378 = sbr.rel (%p376) target = $region36
        $region35: #{tpu_custom_call.1} parent=19 // pred_region
          %s379 = sand.u32 %s24, 1
          %s380 = scalar_lea.sflag [#allocation13], %s379
          %s381 = sand.u32 %s174, 1
          %s382 = smul.addr %s381, 8
          %s383 = scalar_lea.vmem [#allocation12], %s382
          %s384 = smul.u32 %s31, 2
          %s385 = sadd.s32 %s384, %s32
          %387 = vsyncadd %s380, 0
          %s388 = smul.addr %s385, 8
          %s389 = scalar_lea.hbm %s4, %s388
          %s391 = sshll.u32 %s389, 4
          %s392 = int_to_ptr.hbm [resolvable:$true] %s391
          %s393 = sshll.u32 %s383, 4
          %s394 = int_to_ptr.vmem [resolvable:$true] %s393
          %396 = dma.hbm_to_vmem [thread:$0]  %s392, 128, %s394, %s380
        $region36: #{tpu_custom_call.1} parent=19 // pred_fallthru
          _
        // Predicated region
        $region37: #{tpu_custom_call.1} parent=19 // pred_check
          %p397 = pneg %p214
        $region38: #{tpu_custom_call.1} parent=19 // pred_check_branch
          %399 = sbr.rel (%p397) target = $region40
        $region39: #{tpu_custom_call.1} parent=19 // pred_region
          %s400 = sand.u32 %s24, 1
          %s401 = scalar_lea.sflag [#allocation13], %s400
          %s402 = sand.u32 %s204, 1
          %s403 = smul.addr %s402, 8
          %s404 = scalar_lea.vmem [#allocation14], %s403
          %s405 = smul.u32 %s31, 2
          %s406 = sadd.s32 %s405, %s32
          %408 = vsyncadd %s401, 0
          %s409 = smul.addr %s406, 8
          %s410 = scalar_lea.hbm %s5, %s409
          %s412 = sshll.u32 %s410, 4
          %s413 = int_to_ptr.hbm [resolvable:$true] %s412
          %s414 = sshll.u32 %s404, 4
          %s415 = int_to_ptr.vmem [resolvable:$true] %s414
          %417 = dma.hbm_to_vmem [thread:$0]  %s413, 128, %s415, %s401
        $region40: #{tpu_custom_call.1} parent=19 // pred_fallthru
          _
        // Predicated region
        $region41: #{tpu_custom_call.1} parent=19 // pred_check
          %p418 = pneg %p244
        $region42: #{tpu_custom_call.1} parent=19 // pred_check_branch
          %420 = sbr.rel (%p418) target = $region44
        $region43: #{tpu_custom_call.1} parent=19 // pred_region
          %s421 = smul.u32 %s31, 2
          %s422 = sadd.s32 %s421, %s32
          %p423 = scmp.lt.s32.totalorder %s422, 1
          %s424 = scalar_select %p423, %s422, 1
          %s425 = scalar_lea.vmem %s6, %s424
          %s426 = smul.u32 %s31, 2
          %s427 = sadd.s32 %s426, %s32
        $region44: #{tpu_custom_call.1} parent=19 // pred_fallthru
          _
      $region20: #{tpu_custom_call.1} parent=5 // pred_fallthru
        _
      %p428 = scmp.le.s32.totalorder 1, %s24
      %p429 = scmp.lt.s32.totalorder %s24, 3
      %p430 = pnand %p428, %p429
      %p431 = pneg %p430
      // Predicated region
      $region45: #{tpu_custom_call.1} parent=5 // pred_check
        _
      $region46: #{tpu_custom_call.1} parent=5 // pred_check_branch
        %433 = sbr.rel (%p430) target = $region48
      $region47: #{tpu_custom_call.1} parent=5 // pred_region
        %s434 = ssub.s32 %s24, 1
        // Predicated region
        $region49: #{tpu_custom_call.1} parent=47 // pred_check
          %p435 = pneg %p64
        $region50: #{tpu_custom_call.1} parent=47 // pred_check_branch
          %437 = sbr.rel (%p435) target = $region52
        $region51: #{tpu_custom_call.1} parent=47 // pred_region
          %439 = dma.done [#allocation7], 16
        $region52: #{tpu_custom_call.1} parent=47 // pred_fallthru
          _
        %s440 = sand.u32 %s83, 1
        %s441 = scalar_lea.sflag [#allocation5], %s440
        %s442 = sand.u32 %s83, 1
        %s443 = smul.addr %s442, 12
        %s444 = scalar_lea.vmem [#allocation8], %s443
        // Predicated region
        $region53: #{tpu_custom_call.1} parent=47 // pred_check
          %p445 = pneg %p96
        $region54: #{tpu_custom_call.1} parent=47 // pred_check_branch
          %447 = sbr.rel (%p445) target = $region56
        $region55: #{tpu_custom_call.1} parent=47 // pred_region
          %449 = dma.done %s441, 192
        $region56: #{tpu_custom_call.1} parent=47 // pred_fallthru
          _
        %s450 = sand.u32 %s29, 1
        %s451 = scalar_lea.sflag [#allocation10], %s450
        %s452 = sand.u32 %s115, 1
        %s453 = smul.addr %s452, 12
        %s454 = scalar_lea.vmem [#allocation9], %s453
        // Predicated region
        $region57: #{tpu_custom_call.1} parent=47 // pred_check
          %p455 = pneg %p128
        $region58: #{tpu_custom_call.1} parent=47 // pred_check_branch
          %457 = sbr.rel (%p455) target = $region60
        $region59: #{tpu_custom_call.1} parent=47 // pred_region
          %459 = dma.done %s451, 192
        $region60: #{tpu_custom_call.1} parent=47 // pred_fallthru
          _
        %s460 = sand.u32 %s29, 1
        %s461 = scalar_lea.sflag [#allocation10], %s460
        %s462 = sand.u32 %s147, 1
        %s463 = smul.addr %s462, 3
        %s464 = scalar_lea.vmem [#allocation11], %s463
        // Predicated region
        $region61: #{tpu_custom_call.1} parent=47 // pred_check
          %p465 = pneg %p160
        $region62: #{tpu_custom_call.1} parent=47 // pred_check_branch
          %467 = sbr.rel (%p465) target = $region64
        $region63: #{tpu_custom_call.1} parent=47 // pred_region
          %469 = dma.done %s461, 48
        $region64: #{tpu_custom_call.1} parent=47 // pred_fallthru
          _
        %s470 = sand.u32 %s29, 1
        %s471 = scalar_lea.sflag [#allocation13], %s470
        %s472 = sand.u32 %s177, 1
        %s473 = smul.addr %s472, 8
        %s474 = scalar_lea.vmem [#allocation12], %s473
        // Predicated region
        $region65: #{tpu_custom_call.1} parent=47 // pred_check
          %p475 = pneg %p190
        $region66: #{tpu_custom_call.1} parent=47 // pred_check_branch
          %477 = sbr.rel (%p475) target = $region68
        $region67: #{tpu_custom_call.1} parent=47 // pred_region
          %479 = dma.done %s471, 128
        $region68: #{tpu_custom_call.1} parent=47 // pred_fallthru
          _
        %s480 = sand.u32 %s29, 1
        %s481 = scalar_lea.sflag [#allocation13], %s480
        %s482 = sand.u32 %s207, 1
        %s483 = smul.addr %s482, 8
        %s484 = scalar_lea.vmem [#allocation14], %s483
        // Predicated region
        $region69: #{tpu_custom_call.1} parent=47 // pred_check
          %p485 = pneg %p220
        $region70: #{tpu_custom_call.1} parent=47 // pred_check_branch
          %487 = sbr.rel (%p485) target = $region72
        $region71: #{tpu_custom_call.1} parent=47 // pred_region
          %489 = dma.done %s481, 128
        $region72: #{tpu_custom_call.1} parent=47 // pred_fallthru
          _
        %490 = sfence
        %p491 = pneg %p64
        %p492 = pneg %p61
        %s493 = sand.u32 %s83, 1
        %s494 = scalar_lea.sflag [#allocation5], %s493
        %s495 = sand.u32 %s83, 1
        %s496 = smul.addr %s495, 12
        %s497 = scalar_lea.vmem [#allocation8], %s496
        %p498 = pneg %p96
        %p499 = pneg %p93
        %s500 = sand.u32 %s29, 1
        %s501 = scalar_lea.sflag [#allocation10], %s500
        %s502 = sand.u32 %s115, 1
        %s503 = smul.addr %s502, 12
        %s504 = scalar_lea.vmem [#allocation9], %s503
        %p505 = pneg %p128
        %p506 = pneg %p125
        %s507 = sand.u32 %s29, 1
        %s508 = scalar_lea.sflag [#allocation10], %s507
        %s509 = sand.u32 %s147, 1
        %s510 = smul.addr %s509, 3
        %s511 = scalar_lea.vmem [#allocation11], %s510
        %p512 = pneg %p160
        %p513 = pneg %p157
        %s514 = sand.u32 %s29, 1
        %s515 = scalar_lea.sflag [#allocation13], %s514
        %s516 = sand.u32 %s177, 1
        %s517 = smul.addr %s516, 8
        %s518 = scalar_lea.vmem [#allocation12], %s517
        %p519 = pneg %p190
        %p520 = pneg %p187
        %s521 = sand.u32 %s29, 1
        %s522 = scalar_lea.sflag [#allocation13], %s521
        %s523 = sand.u32 %s207, 1
        %s524 = smul.addr %s523, 8
        %s525 = scalar_lea.vmem [#allocation14], %s524
        %p526 = pneg %p220
        %p527 = pneg %p217
        %s528 = smul.u32 %s34, 2
        %s529 = sadd.s32 %s528, %s35
        %p530 = scmp.lt.s32.totalorder %s529, 1
        %s531 = scalar_select %p530, %s529, 1
        %s532 = scalar_lea.vmem %s6, %s531
        %p533 = pneg %p250
        %p534 = pneg %p247
        %p535 = pneg %p276
        %p536 = pneg %p273
        %s537 = smul.u32 %s34, 2
        %s538 = sadd.s32 %s537, %s35
        %s539 = smul.u32 3, %s36
        %s540 = smul.u32 %s34, 2
        %s541 = sadd.s32 %s540, %s35
        %s542 = smul.u32 3, %s36
        %s543 = smul.u32 %s34, 2
        %s544 = sadd.s32 %s543, %s35
        %s545 = smul.u32 3, %s36
        %s546 = smul.u32 %s34, 2
        %s547 = sadd.s32 %s546, %s35
        %s548 = smul.u32 %s34, 2
        %s549 = sadd.s32 %s548, %s35
        %s550 = smul.u32 %s34, 2
        %s551 = sadd.s32 %s550, %s35
        %p552 = scmp.lt.s32.totalorder %s551, 1
        %s553 = scalar_select %p552, %s551, 1
        %s554 = scalar_lea.vmem %s6, %s553
        %s555 = smul.u32 %s34, 2
        %s556 = sadd.s32 %s555, %s35
        %s557 = sld [smem:[#allocation4]]
        %s558 = sld [smem:[#allocation4 + $0x1]]
        %s559 = sld [smem:[#allocation4 + $0x2]]
        %s560 = sld [smem:[#allocation4 + $0x3]]
        %v561 = vld [vmem:[%s444] sm:$0xff]
        %v562 = vld [vmem:[%s444 + $0x8] sm:$0xf]
        %v563 = vld [vmem:[%s454] sm:$0xff]
        %v564 = vld [vmem:[%s454 + $0x8] sm:$0xf]
        %v565 = vsub.f32 %v561, %v563
        %v566 = vsub.f32 %v562, %v564
        %v567 = vmul.f32 %v565, %v565
        %v568 = vmul.f32 %v566, %v566
        %571 = vst [vmem:[#allocation1] ss:$2 sm:$0xff] %v567
        %s572 = scalar_lea.vmem [#allocation1], 16
        %573 = vst [vmem:[%s572] ss:$2 sm:$0xff] %v568
        %v574 = vld.sshfl [vmem:[#allocation1] sm:$0xff pattern:$0x75316420]
        %v575 = vld.sshfl [vmem:[#allocation1 + $0x8] sm:$0xff pattern:$0x75316420]
        %v576 = vld.sshfl [vmem:[#allocation1 + $0x10] sm:$0xff pattern:$0x75316420]
        %vm580 = vcmask 1043456
        %v581 = vsel %vm580, %v574, 0.0
        %v582 = vrot.slane %v581, 4
        %v583 = vadd.f32 %v581, %v582
        %v584 = vrot.slane %v583, 2
        %v585 = vadd.f32 %v583, %v584
        %v586 = vrot.slane %v585, 1
        %v587 = vadd.f32 %v585, %v586
        %v588 = vsel %vm580, %v575, 0.0
        %v589 = vrot.slane %v588, 4
        %v590 = vadd.f32 %v588, %v589
        %v591 = vrot.slane %v590, 2
        %v592 = vadd.f32 %v590, %v591
        %v593 = vrot.slane %v592, 1
        %v594 = vadd.f32 %v592, %v593
        %vm595 = vcmask 519168
        %v596 = vsel %vm595, %v576, 0.0
        %v597 = vrot.slane %v596, 4
        %v598 = vadd.f32 %v596, %v597
        %v599 = vrot.slane %v598, 2
        %v600 = vadd.f32 %v598, %v599
        %v601 = vrot.slane %v600, 1
        %v602 = vadd.f32 %v600, %v601
        %v603 = vld [vmem:[%s464] sm:$0x7]
        %v604 = vstv %s558
        %v605 = vmul.f32 %v604, %v603
        %v606 = vstv %s557
        %v607 = vadd.f32 %v606, %v605
        %v609 = vperm.slane %v607, 0
        %v610 = vperm.slane %v607, 1
        %v611 = vperm.slane %v607, 2
        %v615 = vmul.f32 %v587, %v609
        %v616 = vmul.f32 %v594, %v610
        %v617 = vmul.f32 %v602, %v611
        %p618 = scmp.eq.s32.totalorder %s35, 0
        %p619 = scmp.eq.s32.totalorder %s36, 0
        %p620 = pnand %p618, %p619
        %p621 = pneg %p620
        // Predicated region
        $region73: #{tpu_custom_call.1} parent=47 // pred_check
          _
        $region74: #{tpu_custom_call.1} parent=47 // pred_check_branch
          %623 = sbr.rel (%p620) target = $region76
        $region75: #{tpu_custom_call.1} parent=47 // pred_region
          %v627 = vrot.slane %v616, 7
          %v628 = vrot.slane %v617, 6
          %vm629 = vcmask 1040384
          %v630 = vsel %vm629, %v615, %v627
          %vm631 = vcmask 1041408
          %v632 = vsel %vm631, %v630, %v628
          %v634 = vlaneseq
          %vm635 = vcmp.ge.s32.totalorder %v634, 0
          %vm636 = vcmp.lt.s32.totalorder %v634, 320
          %vm637 = vmand %vm635, %vm636
          %638 = vst.msk [vmem:[#allocation2] sm:$0x7] %vm637, %v632
        $region76: #{tpu_custom_call.1} parent=47 // pred_fallthru
          _
        %p639 = pneg %p621
        // Predicated region
        $region77: #{tpu_custom_call.1} parent=47 // pred_check
          _
        $region78: #{tpu_custom_call.1} parent=47 // pred_check_branch
          %641 = sbr.rel (%p621) target = $region80
        $region79: #{tpu_custom_call.1} parent=47 // pred_region
          %v642 = vld [vmem:[#allocation2] sm:$0x7]
          %v646 = vrot.slane %v616, 7
          %v647 = vrot.slane %v617, 6
          %vm648 = vcmask 1040384
          %v649 = vsel %vm648, %v615, %v646
          %vm650 = vcmask 1041408
          %v651 = vsel %vm650, %v649, %v647
          %v653 = vadd.f32 %v642, %v651
          %v654 = vlaneseq
          %vm655 = vcmp.ge.s32.totalorder %v654, 0
          %vm656 = vcmp.lt.s32.totalorder %v654, 320
          %vm657 = vmand %vm655, %vm656
          %658 = vst.msk [vmem:[#allocation2] sm:$0x7] %vm657, %v653
        $region80: #{tpu_custom_call.1} parent=47 // pred_fallthru
          _
        // Predicated region
        $region81: #{tpu_custom_call.1} parent=47 // pred_check
          %p659 = pneg %p619
        $region82: #{tpu_custom_call.1} parent=47 // pred_check_branch
          %661 = sbr.rel (%p659) target = $region84
        $region83: #{tpu_custom_call.1} parent=47 // pred_region
          %v662 = vld [vmem:[%s474] sm:$0xff]
          %v663 = vld [vmem:[%s484] sm:$0xff]
          %v664 = vsub.f32 %v662, %v663
          %v665 = vmul.f32 %v664, %v664
          %vm666 = vcmask 523264
          %v667 = vsel %vm666, %v665, 0.0
          %v668 = vrot.slane %v667, 4
          %v669 = vadd.f32 %v667, %v668
          %v670 = vrot.slane %v669, 2
          %v671 = vadd.f32 %v669, %v670
          %v672 = vrot.slane %v671, 1
          %v673 = vadd.f32 %v671, %v672
          %v674 = vld [vmem:[%s554] sm:$0x1]
          %v675 = vstv %s560
          %v676 = vmul.f32 %v675, %v674
          %v677 = vstv %s559
          %v678 = vadd.f32 %v677, %v676
          %v679 = vmul.f32 %v673, %v678
          // Predicated region
          $region85: #{tpu_custom_call.1} parent=83 // pred_check
            %p680 = pneg %p618
          $region86: #{tpu_custom_call.1} parent=83 // pred_check_branch
            %682 = sbr.rel (%p680) target = $region88
          $region87: #{tpu_custom_call.1} parent=83 // pred_region
            %vm683 = vcmask 516096
            %684 = vst.msk [vmem:[#allocation3] sm:$0x1] %vm683, %v679
          $region88: #{tpu_custom_call.1} parent=83 // pred_fallthru
            _
          %p685 = scmp.ne.s32.totalorder %s35, 0
          // Predicated region
          $region89: #{tpu_custom_call.1} parent=83 // pred_check
            %p686 = pneg %p685
          $region90: #{tpu_custom_call.1} parent=83 // pred_check_branch
            %688 = sbr.rel (%p686) target = $region92
          $region91: #{tpu_custom_call.1} parent=83 // pred_region
            %v689 = vld [vmem:[#allocation3] sm:$0x1]
            %v690 = vadd.f32 %v689, %v679
            %vm691 = vcmask 516096
            %692 = vst.msk [vmem:[#allocation3] sm:$0x1] %vm691, %v690
          $region92: #{tpu_custom_call.1} parent=83 // pred_fallthru
            _
        $region84: #{tpu_custom_call.1} parent=47 // pred_fallthru
          _
        %p693 = scmp.eq.s32.totalorder %s35, 1
        %p694 = pnand %p693, %p619
        %p695 = pneg %p694
        // Predicated region
        $region93: #{tpu_custom_call.1} parent=47 // pred_check
          _
        $region94: #{tpu_custom_call.1} parent=47 // pred_check_branch
          %697 = sbr.rel (%p694) target = $region96
        $region95: #{tpu_custom_call.1} parent=47 // pred_region
          %v698 = vld [vmem:[#allocation2] sm:$0x7]
          %v700 = vperm.slane %v698, 0
          %v701 = vperm.slane %v698, 1
          %v702 = vperm.slane %v698, 2
          %vm706 = vcmask 1040384
          %v707 = vsel %vm706, %v700, 0.0
          %v708 = vsel %vm706, %v701, 0.0
          %v709 = vadd.f32 %v707, %v708
          %vm710 = vcmask 516096
          %v711 = vsel %vm710, %v702, 0.0
          %v712 = vadd.f32 %v709, %v711
          %713 = vadd.xlane.f32.xlu0 %v712
          %v714 = vpop.xlane.xlu0 %713
          %v715 = vrot.slane %v714, 4
          %v716 = vadd.f32 %v714, %v715
          %v717 = vrot.slane %v716, 2
          %v718 = vadd.f32 %v716, %v717
          %v719 = vrot.slane %v718, 1
          %v720 = vadd.f32 %v718, %v719
          %s721 = vtos %v720
          %v722 = vld [vmem:[#allocation3] sm:$0x1]
          %v723 = vsel %vm710, %v722, 0.0
          %724 = vadd.xlane.f32.xlu0 %v723
          %v725 = vpop.xlane.xlu0 %724
          %v726 = vrot.slane %v725, 4
          %v727 = vadd.f32 %v725, %v726
          %v728 = vrot.slane %v727, 2
          %v729 = vadd.f32 %v727, %v728
          %v730 = vrot.slane %v729, 1
          %v731 = vadd.f32 %v729, %v730
          %s732 = vtos %v731
          %s733 = sadd.f32 %s721, %s732
          %v734 = vstv %s733
          %vm735 = vcmask 0
          %736 = vst.msk [vmem:[#allocation15] sm:$0x1] %vm735, %v734
        $region96: #{tpu_custom_call.1} parent=47 // pred_fallthru
          _
        // Predicated region
        $region97: #{tpu_custom_call.1} parent=47 // pred_check
          %p737 = pneg %p273
        $region98: #{tpu_custom_call.1} parent=47 // pred_check_branch
          %739 = sbr.rel (%p737) target = $region100
        $region99: #{tpu_custom_call.1} parent=47 // pred_region
          %741 = vsyncadd [#allocation6], 0
          %s742 = scalar_lea.hbm %s7, %s34
          %s744 = sshll.u32 [#allocation15], 4
          %s745 = int_to_ptr.vmem [resolvable:$true] %s744
          %s746 = sshll.u32 %s742, 4
          %s747 = int_to_ptr.hbm [resolvable:$true] %s746
          %749 = dma.vmem_to_hbm [thread:$0]  %s745, 16, %s747, [#allocation6]
        $region100: #{tpu_custom_call.1} parent=47 // pred_fallthru
          _
        // Predicated region
        $region101: #{tpu_custom_call.1} parent=47 // pred_check
          %p750 = pneg %p273
        $region102: #{tpu_custom_call.1} parent=47 // pred_check_branch
          %752 = sbr.rel (%p750) target = $region104
        $region103: #{tpu_custom_call.1} parent=47 // pred_region
          %754 = dma.done [#allocation6], 16
        $region104: #{tpu_custom_call.1} parent=47 // pred_fallthru
          _
      $region48: #{tpu_custom_call.1} parent=5 // pred_fallthru
        _
      %p755 = scmp.le.s32.totalorder 2, %s24
      // Predicated region
      $region105: #{tpu_custom_call.1} parent=5 // pred_check
        %p756 = pneg %p755
      $region106: #{tpu_custom_call.1} parent=5 // pred_check_branch
        %758 = sbr.rel (%p756) target = $region108
      $region107: #{tpu_custom_call.1} parent=5 // pred_region
        %s759 = ssub.s32 %s24, 2
      $region108: #{tpu_custom_call.1} parent=5 // pred_fallthru
        _
    $region6: #{tpu_custom_call.1} parent=1 // loop_footer
      %s28 = sadd.s32 1, %s24
    $region7: #{tpu_custom_call.1} parent=1 // loop_footer_branch
      %23 = sbr.rel target = $region3
    $region8: #{tpu_custom_call.1} parent=1 // loop_exit
      _
    %760 = vsyncpa [#allocation5], 1
    %s761 = scalar_lea.sflag [#allocation5], 1
    %762 = vsyncpa %s761, 1
    %763 = vsyncpa [#allocation10], 1
    %s764 = scalar_lea.sflag [#allocation10], 1
    %765 = vsyncpa %s764, 1
    %766 = vsyncpa [#allocation13], 1
    %s767 = scalar_lea.sflag [#allocation13], 1
    %768 = vsyncpa %s767, 1
    %769 = vsyncpa [#allocation6], 1
    %s770 = scalar_lea.sflag [#allocation6], 1
    %771 = vsyncpa %s770, 1
    %772 = vsyncpa [#allocation7], 1
    %s773 = scalar_lea.sflag [#allocation7], 1
    %774 = vsyncpa %s773, 1

</llo_original>
